<compile_context>
chip_gen: v5e
topology: v5e:2x2
jax: 0.10.0
libtpu: 0.0.40
codegen_flags: <defaults>
</compile_context>

<pallas_src>
import functools

import jax
import jax.numpy as jnp
import numpy as np
from jax.experimental import pallas as pl
from jax.experimental.pallas import tpu as pltpu

NODES = 24
CHANNELS = [8, 4, 1]            # channel_num_list
DENSE = [5, (8 + 4) * 24]       # dense_num_list  -> [5, 288]
SEQ_LEN = 10


# ---------------------------------------------------------------------------
# Static layouts of the packed weight / bias buffers (shared by the wrapper
# packing code and the in-kernel static slicing).
# ---------------------------------------------------------------------------
def _weight_layout(batch):
    B, (C0, C1, C2) = batch, CHANNELS
    rows = [2 * B * C0, B * C0, 3 * B * C1, 2 * B * C1, B * C1, 2 * B * C2]
    cols = [B * C0,     B * C0, B * C0,     B * C1,     B * C1, B * C1]
    offs = [0]
    for r in rows[:-1]:
        offs.append(offs[-1] + r)
    return rows, cols, offs


def _bias_layout(batch):
    B, (C0, C1, C2) = batch, CHANNELS
    rows = [2 * B * C0, B * C0, 2 * B * C1, B * C1, 2 * B * C2]
    offs = [0]
    for r in rows[:-1]:
        offs.append(offs[-1] + r)
    return rows, offs


# ---------------------------------------------------------------------------
# One-time parameter packing (weight folding): gate fusion, batch block-diag
# expansion, eos x-path folding.  Called once outside the forward pass.
# ---------------------------------------------------------------------------
def pack_decoder_params(params, batch):
    B = batch
    C0, C1, C2 = CHANNELS
    eye_b = jnp.eye(B, dtype=jnp.float32)

    def kT(w):       # batch block-diagonal + transpose: (B*out, B*in)
        return jnp.kron(eye_b, w.T)

    def repT(w):     # batch replicate + transpose (for the batch-invariant eos input)
        return jnp.tile(w.T, (B, 1))

    def btile(b):    # (1, out) -> (B*out, 1)
        return jnp.tile(b.reshape(-1, 1), (B, 1))

    g = params["gru"]
    (wzx0, wzh0, bz0, wrx0, wrh0, br0, whx0, whh0, bh0) = g[0:9]
    (wzx1, wzh1, bz1, wrx1, wrh1, br1, whx1, whh1, bh1) = g[9:18]
    (wzx2, wzh2, bz2, wrx2, wrh2, br2, whx2, whh2, bh2) = g[18:27]

    # Cell-0 x-path depends only on parameters (x == eos for every timestep and
    # every batch element): fold eos @ [Wzx | Wrx | Whx] here.  Rows are
    # gate-major, batch-replicated -> (3*B*C0, N).
    eosT = params["eos"].T                                                 # (C0, N)
    wx0 = jnp.concatenate([repT(wzx0), repT(wrx0), repT(whx0)], axis=0)    # (3*B*C0, C0)
    px0 = wx0 @ eosT                                                       # (3*B*C0, N)

    wblocks = [
        jnp.concatenate([kT(wzh0), kT(wrh0)], axis=0),             # (2*B*C0, B*C0)
        kT(whh0),                                                  # (B*C0,   B*C0)
        jnp.concatenate([kT(wzx1), kT(wrx1), kT(whx1)], axis=0),   # (3*B*C1, B*C0)
        jnp.concatenate([kT(wzh1), kT(wrh1)], axis=0),             # (2*B*C1, B*C1)
        kT(whh1),                                                  # (B*C1,   B*C1)
        jnp.concatenate([kT(wzx2), kT(whx2)], axis=0),             # (2*B*C2, B*C1)
    ]
    bblocks = [
        jnp.concatenate([btile(bz0), btile(br0)], axis=0),
        btile(bh0),
        jnp.concatenate([btile(bz1), btile(br1)], axis=0),
        btile(bh1),
        jnp.concatenate([btile(bz2), btile(bh2)], axis=0),
    ]

    rows, cols, _ = _weight_layout(B)
    wmax = max(cols)
    w_buf = jnp.concatenate(
        [jnp.pad(w, ((0, 0), (0, wmax - w.shape[1]))) for w in wblocks], axis=0)
    b_buf = jnp.concatenate(bblocks, axis=0)
    assert w_buf.shape == (sum(rows), wmax)

    return {
        "px0": px0,                     # (3*B*C0, N)   folded eos projections
        "w_buf": w_buf,                 # (sum_rows, B*C0)  packed GRU weights
        "b_buf": b_buf,                 # (sum_brows, 1)    packed GRU biases
        "dense_w": params["dense_w"],
        "dense_b": params["dense_b"],
    }


# ---------------------------------------------------------------------------
# The fused decoder-step kernel: 3 GC-GRU cells (+ relu), whole batch at once.
# Layout: activations are (batch*channels, nodes); graph conv is preT @ adj.T.
# ---------------------------------------------------------------------------
def _decoder_kernel(h0_ref, h1_ref, px0_ref, adj_ref, w_ref, b_ref, o_ref, *, batch):
    B = batch
    C0, C1, C2 = CHANNELS
    dot = functools.partial(jnp.dot, preferred_element_type=jnp.float32)

    adjT = adj_ref[...]            # (N, N)  == adj.T
    h0 = h0_ref[...]               # (B*C0, N)  hidden state for cell 0
    h1 = h1_ref[...]               # (B*C1, N)  hidden state for cell 1
    px0 = px0_ref[...]             # (3*B*C0, N) folded eos @ [Wzx|Wrx|Whx]
    w = w_ref[...]                 # packed weight slab
    bias = b_ref[...]              # packed bias slab

    wrows, wcols, woffs = _weight_layout(B)
    brows, boffs = _bias_layout(B)
    wh0zr, whh0, wx1, wh1zr, whh1, wx2 = [
        w[woffs[i]:woffs[i] + wrows[i], :wcols[i]] for i in range(len(wrows))]
    bzr0, bh0, bzr1, bh1, b2 = [
        bias[boffs[i]:boffs[i] + brows[i], :] for i in range(len(brows))]

    # ---- cell 0: GCGRU(8 -> 8), x = eos (x-path precomputed), h = hs[0] ----
    px_zr0 = px0[: 2 * B * C0]
    px_h0 = px0[2 * B * C0:]
    g_zr0 = dot(px_zr0 + dot(wh0zr, h0), adjT) + bzr0          # (2*B*C0, N)
    z0 = jax.nn.sigmoid(g_zr0[: B * C0])
    r0 = jax.nn.sigmoid(g_zr0[B * C0:])
    ht0 = jnp.tanh(dot(px_h0 + dot(whh0, r0 * h0), adjT) + bh0)
    x1 = jax.nn.relu(z0 * h0 + (1.0 - z0) * ht0)               # (B*C0, N)

    # ---- cell 1: GCGRU(8 -> 4), h = hs[1] ----
    px1 = dot(wx1, x1)                                         # (3*B*C1, N)
    g_zr1 = dot(px1[: 2 * B * C1] + dot(wh1zr, h1), adjT) + bzr1
    z1 = jax.nn.sigmoid(g_zr1[: B * C1])
    r1 = jax.nn.sigmoid(g_zr1[B * C1:])
    ht1 = jnp.tanh(dot(px1[2 * B * C1:] + dot(whh1, r1 * h1), adjT) + bh1)
    x2 = jax.nn.relu(z1 * h1 + (1.0 - z1) * ht1)               # (B*C1, N)

    # ---- cell 2: GCGRU(4 -> 1), h = None (zeros) ----
    # r gate and every h-path matmul are mathematically dead (r*h == 0): skipped.
    g2 = dot(dot(wx2, x2), adjT) + b2                          # (2*B*C2, N)
    z2 = jax.nn.sigmoid(g2[: B * C2])
    ht2 = jnp.tanh(g2[B * C2:])
    o_ref[...] = jax.nn.relu((1.0 - z2) * ht2)                 # (B, N), lane-dense


def _gru_chain(h0T, h1T, px0, adjT, w_buf, b_buf, batch):
    B, N = batch, NODES

    def full(shape):
        nd = len(shape)
        return pl.BlockSpec(shape, lambda i, _nd=nd: (0,) * _nd)

    return pl.pallas_call(
        functools.partial(_decoder_kernel, batch=B),
        out_shape=jax.ShapeDtypeStruct((B, N), jnp.float32),
        grid=(1,),   # single grid step: batch is packed into the matmuls
        in_specs=[full(h0T.shape), full(h1T.shape), full(px0.shape),
                  full(adjT.shape), full(w_buf.shape), full(b_buf.shape)],
        out_specs=pl.BlockSpec((B, N), lambda i: (0, 0)),
        compiler_params=pltpu.CompilerParams(
            dimension_semantics=("arbitrary",)),
    )(h0T, h1T, px0, adjT, w_buf, b_buf)


# ---------------------------------------------------------------------------
# Full forward (glue in plain XLA)
# ---------------------------------------------------------------------------
def decoder_rnn_forward(xs, adj, packed):
    B = xs.shape[0]
    N = NODES
    C0, C1 = CHANNELS[0], CHANNELS[1]
    # dense_list[:-1] is empty for the default config; only sigmoid(Linear(5,288)).
    # The tiny dense + hidden-state repack run as plain XLA feeding the kernel.
    y = jax.nn.sigmoid(xs @ packed["dense_w"] + packed["dense_b"])        # (B, 288)
    y = y.reshape(B, N, C0 + C1)                                          # (B, 24, 12)
    # tm = reversed(channel_num_list[:-1]) = [4, 8]; split([4,8], -1), then reverse.
    h0T = y[:, :, C1:].transpose(0, 2, 1).reshape(B * C0, N)              # (B*8, 24)
    h1T = y[:, :, :C1].transpose(0, 2, 1).reshape(B * C1, N)              # (B*4, 24)
    step = _gru_chain(h0T, h1T, packed["px0"], adj.T,
                      packed["w_buf"], packed["b_buf"], B)                # (B, 24)
    step = step.reshape(B, N, CHANNELS[-1])                               # (B, 24, 1)
    # NOTE: the reference forward never feeds next_hs back into hs, so every one
    # of the seq_len timesteps is identical; broadcasting == torch.stack(result).
    return jnp.broadcast_to(step[None], (SEQ_LEN,) + step.shape)


# ---------------------------------------------------------------------------
# Pure-JAX reference (for correctness check)
# ---------------------------------------------------------------------------
def ref_forward(xs, adj, p):
    B = xs.shape[0]
    y = jax.nn.sigmoid(xs @ p["dense_w"] + p["dense_b"])
    y = y.reshape(B, -1, sum(CHANNELS[:-1]))
    hs = [y[:, :, CHANNELS[1]:], y[:, :, :CHANNELS[1]],
          jnp.zeros((B, NODES, CHANNELS[-1]), jnp.float32)]
    x = jnp.broadcast_to(p["eos"], (B, NODES, CHANNELS[0]))
    for i in range(3):
        wzx, wzh, bz, wrx, wrh, br, whx, whh, bh = p["gru"][9 * i: 9 * (i + 1)]
        h = hs[i]
        gc = lambda u: jnp.einsum("mn,bnc->bmc", adj, u)
        z = jax.nn.sigmoid(gc(x @ wzx + h @ wzh) + bz)
        r = jax.nn.sigmoid(gc(x @ wrx + h @ wrh) + br)
        ht = jnp.tanh(gc(x @ whx + (r * h) @ whh) + bh)
        x = jax.nn.relu(z * h + (1.0 - z) * ht)
    return jnp.broadcast_to(x[None], (SEQ_LEN, B, NODES, CHANNELS[-1]))


# ---------------------------------------------------------------------------
# Deterministic parameter initialization (synthetic; no checkpoint loading)
# ---------------------------------------------------------------------------
def init_params(key):
    keys = iter(jax.random.split(key, 40))

    def u(shape, scale):
        return jax.random.uniform(next(keys), shape, jnp.float32, -scale, scale)

    params = {}
    sd = 1.0 / (DENSE[0] ** 0.5)
    params["dense_w"] = u((DENSE[0], DENSE[1]), sd)
    params["dense_b"] = u((1, DENSE[1]), sd)
    params["eos"] = u((NODES, CHANNELS[0]), 1.0)      # eos.uniform_(-1, 1)

    cell_dims = [(CHANNELS[0], CHANNELS[0])] + list(zip(CHANNELS[:-1], CHANNELS[1:]))
    gru = []
    for cin, cout in cell_dims:                       # (8,8), (8,4), (4,1)
        s = 1.0 / ((cin + cout) ** 0.5)
        for _gate in range(3):                        # z, r, h~
            gru.append(u((cin, cout), s))             # W_x
            gru.append(u((cout, cout), s))            # W_h
            gru.append(u((1, cout), s))               # bias
    params["gru"] = gru
    return params


if __name__ == "__main__":
    key = jax.random.PRNGKey(0)
    kp, kx, ka = jax.random.split(key, 3)
    params = init_params(kp)

    B = 2
    xs = jax.random.normal(kx, (B, DENSE[0]), jnp.float32)            # (2, 5)
    adj = jax.random.uniform(ka, (NODES, NODES), jnp.float32)         # (24, 24)

    packed = pack_decoder_params(params, B)           # one-time weight folding/packing
    fwd = jax.jit(decoder_rnn_forward)

    out = jax.block_until_ready(fwd(xs, adj, packed))
    assert out.shape == (SEQ_LEN, B, NODES, CHANNELS[-1])

    ref = ref_forward(xs, adj, params)
    np.testing.assert_allclose(np.asarray(out), np.asarray(ref), rtol=1e-5, atol=2e-5)

    print("KERNEL_OK")
</pallas_src>

<mosaic_0001>
module attributes {stable_mosaic.version = 11 : i64} {
  func.func @_decoder_kernel(%arg0: i32, %arg1: memref<16x24xf32, #tpu.memory_space<vmem>>, %arg2: memref<8x24xf32, #tpu.memory_space<vmem>>, %arg3: memref<48x24xf32, #tpu.memory_space<vmem>>, %arg4: memref<24x24xf32, #tpu.memory_space<vmem>>, %arg5: memref<100x16xf32, #tpu.memory_space<vmem>>, %arg6: memref<76x1xf32, #tpu.memory_space<vmem>>, %arg7: memref<2x24xf32, #tpu.memory_space<vmem>>) attributes {dimension_semantics = [#tpu.dimension_semantics<arbitrary>], iteration_bounds = array<i64: 1>, scalar_prefetch = 0 : i64, scratch_operands = 0 : i64, tpu.core_type = #tpu.core_type<tc>, window_params = [{pipeline_mode = #tpu.pipeline_mode<synchronous>, transform_indices = @transform_0, window_bounds = array<i64: 16, 24>}, {pipeline_mode = #tpu.pipeline_mode<synchronous>, transform_indices = @transform_1, window_bounds = array<i64: 8, 24>}, {pipeline_mode = #tpu.pipeline_mode<synchronous>, transform_indices = @transform_2, window_bounds = array<i64: 48, 24>}, {pipeline_mode = #tpu.pipeline_mode<synchronous>, transform_indices = @transform_3, window_bounds = array<i64: 24, 24>}, {pipeline_mode = #tpu.pipeline_mode<synchronous>, transform_indices = @transform_4, window_bounds = array<i64: 100, 16>}, {pipeline_mode = #tpu.pipeline_mode<synchronous>, transform_indices = @transform_5, window_bounds = array<i64: 76, 1>}, {pipeline_mode = #tpu.pipeline_mode<synchronous>, transform_indices = @transform_6, window_bounds = array<i64: 2, 24>}]} {
    %c0 = arith.constant 0 : index
    %c0_0 = arith.constant 0 : index
    %0 = vector.load %arg4[%c0, %c0_0] : memref<24x24xf32, #tpu.memory_space<vmem>>, vector<24x24xf32>
    %c0_1 = arith.constant 0 : index
    %c0_2 = arith.constant 0 : index
    %1 = vector.load %arg1[%c0_1, %c0_2] : memref<16x24xf32, #tpu.memory_space<vmem>>, vector<16x24xf32>
    %c0_3 = arith.constant 0 : index
    %c0_4 = arith.constant 0 : index
    %2 = vector.load %arg2[%c0_3, %c0_4] : memref<8x24xf32, #tpu.memory_space<vmem>>, vector<8x24xf32>
    %c0_5 = arith.constant 0 : index
    %c0_6 = arith.constant 0 : index
    %3 = vector.load %arg3[%c0_5, %c0_6] : memref<48x24xf32, #tpu.memory_space<vmem>>, vector<48x24xf32>
    %c0_7 = arith.constant 0 : index
    %c0_8 = arith.constant 0 : index
    %4 = vector.load %arg5[%c0_7, %c0_8] : memref<100x16xf32, #tpu.memory_space<vmem>>, vector<100x16xf32>
    %c0_9 = arith.constant 0 : index
    %c0_10 = arith.constant 0 : index
    %5 = vector.load %arg6[%c0_9, %c0_10] : memref<76x1xf32, #tpu.memory_space<vmem>>, vector<76x1xf32>
    %6 = vector.extract_strided_slice %4 {offsets = [0, 0], sizes = [32, 16], strides = [1, 1]} : vector<100x16xf32> to vector<32x16xf32>
    %7 = vector.extract_strided_slice %4 {offsets = [32, 0], sizes = [16, 16], strides = [1, 1]} : vector<100x16xf32> to vector<16x16xf32>
    %8 = vector.extract_strided_slice %4 {offsets = [48, 0], sizes = [24, 16], strides = [1, 1]} : vector<100x16xf32> to vector<24x16xf32>
    %9 = vector.extract_strided_slice %4 {offsets = [72, 0], sizes = [16, 8], strides = [1, 1]} : vector<100x16xf32> to vector<16x8xf32>
    %10 = vector.extract_strided_slice %4 {offsets = [88, 0], sizes = [8, 8], strides = [1, 1]} : vector<100x16xf32> to vector<8x8xf32>
    %11 = vector.extract_strided_slice %4 {offsets = [96, 0], sizes = [4, 8], strides = [1, 1]} : vector<100x16xf32> to vector<4x8xf32>
    %12 = vector.extract_strided_slice %5 {offsets = [0, 0], sizes = [32, 1], strides = [1, 1]} : vector<76x1xf32> to vector<32x1xf32>
    %13 = vector.extract_strided_slice %5 {offsets = [32, 0], sizes = [16, 1], strides = [1, 1]} : vector<76x1xf32> to vector<16x1xf32>
    %14 = vector.extract_strided_slice %5 {offsets = [48, 0], sizes = [16, 1], strides = [1, 1]} : vector<76x1xf32> to vector<16x1xf32>
    %15 = vector.extract_strided_slice %5 {offsets = [64, 0], sizes = [8, 1], strides = [1, 1]} : vector<76x1xf32> to vector<8x1xf32>
    %16 = vector.extract_strided_slice %5 {offsets = [72, 0], sizes = [4, 1], strides = [1, 1]} : vector<76x1xf32> to vector<4x1xf32>
    %17 = vector.extract_strided_slice %3 {offsets = [0, 0], sizes = [32, 24], strides = [1, 1]} : vector<48x24xf32> to vector<32x24xf32>
    %18 = vector.extract_strided_slice %3 {offsets = [32, 0], sizes = [16, 24], strides = [1, 1]} : vector<48x24xf32> to vector<16x24xf32>
    %cst = arith.constant dense<0.000000e+00> : vector<32x24xf32>
    %19 = tpu.matmul %6, %1, %cst {dimension_numbers = #tpu.dot_dimension_numbers<[1], [0], [0], [1], [0, 0, 1, 1], [], []>} : vector<32x16xf32>, vector<16x24xf32>, vector<32x24xf32> -> vector<32x24xf32>
    %20 = arith.addf %17, %19 : vector<32x24xf32>
    %cst_11 = arith.constant dense<0.000000e+00> : vector<32x24xf32>
    %21 = tpu.matmul %20, %0, %cst_11 {dimension_numbers = #tpu.dot_dimension_numbers<[1], [0], [0], [1], [0, 0, 1, 1], [], []>} : vector<32x24xf32>, vector<24x24xf32>, vector<32x24xf32> -> vector<32x24xf32>
    %22 = vector.broadcast %12 : vector<32x1xf32> to vector<32x24xf32>
    %23 = arith.addf %21, %22 : vector<32x24xf32>
    %24 = vector.extract_strided_slice %23 {offsets = [0, 0], sizes = [16, 24], strides = [1, 1]} : vector<32x24xf32> to vector<16x24xf32>
    %25 = arith.negf %24 : vector<16x24xf32>
    %26 = math.exp %25 : vector<16x24xf32>
    %cst_12 = arith.constant 1.000000e+00 : f32
    %27 = vector.broadcast %cst_12 : f32 to vector<16x24xf32>
    %28 = arith.addf %27, %26 : vector<16x24xf32>
    %29 = arith.divf %27, %28 : vector<16x24xf32>
    %30 = vector.extract_strided_slice %23 {offsets = [16, 0], sizes = [16, 24], strides = [1, 1]} : vector<32x24xf32> to vector<16x24xf32>
    %31 = arith.negf %30 : vector<16x24xf32>
    %32 = math.exp %31 : vector<16x24xf32>
    %cst_13 = arith.constant 1.000000e+00 : f32
    %33 = vector.broadcast %cst_13 : f32 to vector<16x24xf32>
    %34 = arith.addf %33, %32 : vector<16x24xf32>
    %35 = arith.divf %33, %34 : vector<16x24xf32>
    %36 = arith.mulf %35, %1 : vector<16x24xf32>
    %cst_14 = arith.constant dense<0.000000e+00> : vector<16x24xf32>
    %37 = tpu.matmul %7, %36, %cst_14 {dimension_numbers = #tpu.dot_dimension_numbers<[1], [0], [0], [1], [0, 0, 1, 1], [], []>} : vector<16x16xf32>, vector<16x24xf32>, vector<16x24xf32> -> vector<16x24xf32>
    %38 = arith.addf %18, %37 : vector<16x24xf32>
    %cst_15 = arith.constant dense<0.000000e+00> : vector<16x24xf32>
    %39 = tpu.matmul %38, %0, %cst_15 {dimension_numbers = #tpu.dot_dimension_numbers<[1], [0], [0], [1], [0, 0, 1, 1], [], []>} : vector<16x24xf32>, vector<24x24xf32>, vector<16x24xf32> -> vector<16x24xf32>
    %40 = vector.broadcast %13 : vector<16x1xf32> to vector<16x24xf32>
    %41 = arith.addf %39, %40 : vector<16x24xf32>
    %42 = math.tanh %41 : vector<16x24xf32>
    %43 = arith.mulf %29, %1 : vector<16x24xf32>
    %cst_16 = arith.constant 1.000000e+00 : f32
    %44 = vector.broadcast %cst_16 : f32 to vector<16x24xf32>
    %45 = arith.subf %44, %29 : vector<16x24xf32>
    %46 = arith.mulf %45, %42 : vector<16x24xf32>
    %47 = arith.addf %43, %46 : vector<16x24xf32>
    %cst_17 = arith.constant 0.000000e+00 : f32
    %48 = vector.broadcast %cst_17 : f32 to vector<16x24xf32>
    %49 = arith.maximumf %47, %48 : vector<16x24xf32>
    %cst_18 = arith.constant dense<0.000000e+00> : vector<24x24xf32>
    %50 = tpu.matmul %8, %49, %cst_18 {dimension_numbers = #tpu.dot_dimension_numbers<[1], [0], [0], [1], [0, 0, 1, 1], [], []>} : vector<24x16xf32>, vector<16x24xf32>, vector<24x24xf32> -> vector<24x24xf32>
    %51 = vector.extract_strided_slice %50 {offsets = [0, 0], sizes = [16, 24], strides = [1, 1]} : vector<24x24xf32> to vector<16x24xf32>
    %cst_19 = arith.constant dense<0.000000e+00> : vector<16x24xf32>
    %52 = tpu.matmul %9, %2, %cst_19 {dimension_numbers = #tpu.dot_dimension_numbers<[1], [0], [0], [1], [0, 0, 1, 1], [], []>} : vector<16x8xf32>, vector<8x24xf32>, vector<16x24xf32> -> vector<16x24xf32>
    %53 = arith.addf %51, %52 : vector<16x24xf32>
    %cst_20 = arith.constant dense<0.000000e+00> : vector<16x24xf32>
    %54 = tpu.matmul %53, %0, %cst_20 {dimension_numbers = #tpu.dot_dimension_numbers<[1], [0], [0], [1], [0, 0, 1, 1], [], []>} : vector<16x24xf32>, vector<24x24xf32>, vector<16x24xf32> -> vector<16x24xf32>
    %55 = vector.broadcast %14 : vector<16x1xf32> to vector<16x24xf32>
    %56 = arith.addf %54, %55 : vector<16x24xf32>
    %57 = vector.extract_strided_slice %56 {offsets = [0, 0], sizes = [8, 24], strides = [1, 1]} : vector<16x24xf32> to vector<8x24xf32>
    %58 = arith.negf %57 : vector<8x24xf32>
    %59 = math.exp %58 : vector<8x24xf32>
    %cst_21 = arith.constant 1.000000e+00 : f32
    %60 = vector.broadcast %cst_21 : f32 to vector<8x24xf32>
    %61 = arith.addf %60, %59 : vector<8x24xf32>
    %62 = arith.divf %60, %61 : vector<8x24xf32>
    %63 = vector.extract_strided_slice %56 {offsets = [8, 0], sizes = [8, 24], strides = [1, 1]} : vector<16x24xf32> to vector<8x24xf32>
    %64 = arith.negf %63 : vector<8x24xf32>
    %65 = math.exp %64 : vector<8x24xf32>
    %cst_22 = arith.constant 1.000000e+00 : f32
    %66 = vector.broadcast %cst_22 : f32 to vector<8x24xf32>
    %67 = arith.addf %66, %65 : vector<8x24xf32>
    %68 = arith.divf %66, %67 : vector<8x24xf32>
    %69 = vector.extract_strided_slice %50 {offsets = [16, 0], sizes = [8, 24], strides = [1, 1]} : vector<24x24xf32> to vector<8x24xf32>
    %70 = arith.mulf %68, %2 : vector<8x24xf32>
    %cst_23 = arith.constant dense<0.000000e+00> : vector<8x24xf32>
    %71 = tpu.matmul %10, %70, %cst_23 {dimension_numbers = #tpu.dot_dimension_numbers<[1], [0], [0], [1], [0, 0, 1, 1], [], []>} : vector<8x8xf32>, vector<8x24xf32>, vector<8x24xf32> -> vector<8x24xf32>
    %72 = arith.addf %69, %71 : vector<8x24xf32>
    %cst_24 = arith.constant dense<0.000000e+00> : vector<8x24xf32>
    %73 = tpu.matmul %72, %0, %cst_24 {dimension_numbers = #tpu.dot_dimension_numbers<[1], [0], [0], [1], [0, 0, 1, 1], [], []>} : vector<8x24xf32>, vector<24x24xf32>, vector<8x24xf32> -> vector<8x24xf32>
    %74 = vector.broadcast %15 : vector<8x1xf32> to vector<8x24xf32>
    %75 = arith.addf %73, %74 : vector<8x24xf32>
    %76 = math.tanh %75 : vector<8x24xf32>
    %77 = arith.mulf %62, %2 : vector<8x24xf32>
    %cst_25 = arith.constant 1.000000e+00 : f32
    %78 = vector.broadcast %cst_25 : f32 to vector<8x24xf32>
    %79 = arith.subf %78, %62 : vector<8x24xf32>
    %80 = arith.mulf %79, %76 : vector<8x24xf32>
    %81 = arith.addf %77, %80 : vector<8x24xf32>
    %cst_26 = arith.constant 0.000000e+00 : f32
    %82 = vector.broadcast %cst_26 : f32 to vector<8x24xf32>
    %83 = arith.maximumf %81, %82 : vector<8x24xf32>
    %cst_27 = arith.constant dense<0.000000e+00> : vector<4x24xf32>
    %84 = tpu.matmul %11, %83, %cst_27 {dimension_numbers = #tpu.dot_dimension_numbers<[1], [0], [0], [1], [0, 0, 1, 1], [], []>} : vector<4x8xf32>, vector<8x24xf32>, vector<4x24xf32> -> vector<4x24xf32>
    %cst_28 = arith.constant dense<0.000000e+00> : vector<4x24xf32>
    %85 = tpu.matmul %84, %0, %cst_28 {dimension_numbers = #tpu.dot_dimension_numbers<[1], [0], [0], [1], [0, 0, 1, 1], [], []>} : vector<4x24xf32>, vector<24x24xf32>, vector<4x24xf32> -> vector<4x24xf32>
    %86 = vector.broadcast %16 : vector<4x1xf32> to vector<4x24xf32>
    %87 = arith.addf %85, %86 : vector<4x24xf32>
    %88 = vector.extract_strided_slice %87 {offsets = [0, 0], sizes = [2, 24], strides = [1, 1]} : vector<4x24xf32> to vector<2x24xf32>
    %89 = arith.negf %88 : vector<2x24xf32>
    %90 = math.exp %89 : vector<2x24xf32>
    %cst_29 = arith.constant 1.000000e+00 : f32
    %91 = vector.broadcast %cst_29 : f32 to vector<2x24xf32>
    %92 = arith.addf %91, %90 : vector<2x24xf32>
    %93 = arith.divf %91, %92 : vector<2x24xf32>
    %94 = vector.extract_strided_slice %87 {offsets = [2, 0], sizes = [2, 24], strides = [1, 1]} : vector<4x24xf32> to vector<2x24xf32>
    %95 = math.tanh %94 : vector<2x24xf32>
    %cst_30 = arith.constant 1.000000e+00 : f32
    %96 = vector.broadcast %cst_30 : f32 to vector<2x24xf32>
    %97 = arith.subf %96, %93 : vector<2x24xf32>
    %98 = arith.mulf %97, %95 : vector<2x24xf32>
    %cst_31 = arith.constant 0.000000e+00 : f32
    %99 = vector.broadcast %cst_31 : f32 to vector<2x24xf32>
    %100 = arith.maximumf %98, %99 : vector<2x24xf32>
    %c0_32 = arith.constant 0 : index
    %c0_33 = arith.constant 0 : index
    %101 = vector.load %arg7[%c0_32, %c0_33] : memref<2x24xf32, #tpu.memory_space<vmem>>, vector<2x24xf32>
    tpu.vector_store %arg7[%c0_32, %c0_33], %100 {strides = array<i32>} : memref<2x24xf32, #tpu.memory_space<vmem>>, vector<2x24xf32>,
    return
  }
  func.func @transform_0(%arg0: i32) -> (i32, i32) {
    %c0_i32 = arith.constant 0 : i32
    %c0_i32_0 = arith.constant 0 : i32
    %c0_i32_1 = arith.constant 0 : i32
    return %c0_i32, %c0_i32_0 : i32, i32
  }
  func.func @transform_1(%arg0: i32) -> (i32, i32) {
    %c0_i32 = arith.constant 0 : i32
    %c0_i32_0 = arith.constant 0 : i32
    %c0_i32_1 = arith.constant 0 : i32
    return %c0_i32, %c0_i32_0 : i32, i32
  }
  func.func @transform_2(%arg0: i32) -> (i32, i32) {
    %c0_i32 = arith.constant 0 : i32
    %c0_i32_0 = arith.constant 0 : i32
    %c0_i32_1 = arith.constant 0 : i32
    return %c0_i32, %c0_i32_0 : i32, i32
  }
  func.func @transform_3(%arg0: i32) -> (i32, i32) {
    %c0_i32 = arith.constant 0 : i32
    %c0_i32_0 = arith.constant 0 : i32
    %c0_i32_1 = arith.constant 0 : i32
    return %c0_i32, %c0_i32_0 : i32, i32
  }
  func.func @transform_4(%arg0: i32) -> (i32, i32) {
    %c0_i32 = arith.constant 0 : i32
    %c0_i32_0 = arith.constant 0 : i32
    %c0_i32_1 = arith.constant 0 : i32
    return %c0_i32, %c0_i32_0 : i32, i32
  }
  func.func @transform_5(%arg0: i32) -> (i32, i32) {
    %c0_i32 = arith.constant 0 : i32
    %c0_i32_0 = arith.constant 0 : i32
    %c0_i32_1 = arith.constant 0 : i32
    return %c0_i32, %c0_i32_0 : i32, i32
  }
  func.func @transform_6(%arg0: i32) -> (i32, i32) {
    %c0_i32 = arith.constant 0 : i32
    %c0_i32_0 = arith.constant 0 : i32
    %c0_i32_1 = arith.constant 0 : i32
    return %c0_i32, %c0_i32_0 : i32, i32
  }
}

</mosaic_0001>

<llo_original>
// kernel: decoder_rnn_forward.1
$region0: #{decoder_rnn_forward.1}
  #allocation0 [shape = 'u32[]', space=smem, size = 0x4, offset = 0x4, fixed_abs, tag = 'smem constant byte address 0x4 - core index']
  #allocation1 [shape = 'u32[72,128]{1,0:T(1,128)}', space=vmem, size = 0x9000, scoped, tag = 'internal scratch']
  %s0 = inlined_call_operand.vmem [shape: f32[16,24], index: 0, kind: input, shape index: {}]
  %s1 = inlined_call_operand.vmem [shape: f32[8,24], index: 1, kind: input, shape index: {}]
  %s2 = inlined_call_operand.vmem [shape: f32[48,24], index: 2, kind: input, shape index: {}]
  %s3 = inlined_call_operand.vmem [shape: f32[24,24], index: 3, kind: input, shape index: {}]
  %s4 = inlined_call_operand.vmem [shape: f32[100,16], index: 4, kind: input, shape index: {}]
  %s5 = inlined_call_operand.vmem [shape: f32[76,1], index: 5, kind: input, shape index: {}]
  %s6 = inlined_call_operand.vmem [shape: f32[2,24], index: 6, kind: output, shape index: {}]
  %s7 = sld [smem:[#allocation0]]
  $region34: #{decoder_rnn_forward.1} parent=0
    _
  %s9 = ssub.s32 1, %s7
  %s10 = scalar_select 0, %s9, %s7
  // Predicated region
  $region2: #{decoder_rnn_forward.1} parent=0 // pred_check
    _
  $region3: #{decoder_rnn_forward.1} parent=0 // pred_check_branch
    %12 = sbr.rel (0) target = $region5
  $region4: #{decoder_rnn_forward.1} parent=0 // pred_region
    _
  $region5: #{decoder_rnn_forward.1} parent=0 // pred_fallthru
    _
  // Predicated region
  $region6: #{decoder_rnn_forward.1} parent=0 // pred_check
    _
  $region7: #{decoder_rnn_forward.1} parent=0 // pred_check_branch
    %14 = sbr.rel (0) target = $region9
  $region8: #{decoder_rnn_forward.1} parent=0 // pred_region
    _
  $region9: #{decoder_rnn_forward.1} parent=0 // pred_fallthru
    _
  // Predicated region
  $region10: #{decoder_rnn_forward.1} parent=0 // pred_check
    _
  $region11: #{decoder_rnn_forward.1} parent=0 // pred_check_branch
    %16 = sbr.rel (0) target = $region13
  $region12: #{decoder_rnn_forward.1} parent=0 // pred_region
    _
  $region13: #{decoder_rnn_forward.1} parent=0 // pred_fallthru
    _
  // Predicated region
  $region14: #{decoder_rnn_forward.1} parent=0 // pred_check
    _
  $region15: #{decoder_rnn_forward.1} parent=0 // pred_check_branch
    %18 = sbr.rel (0) target = $region17
  $region16: #{decoder_rnn_forward.1} parent=0 // pred_region
    _
  $region17: #{decoder_rnn_forward.1} parent=0 // pred_fallthru
    _
  // Predicated region
  $region18: #{decoder_rnn_forward.1} parent=0 // pred_check
    _
  $region19: #{decoder_rnn_forward.1} parent=0 // pred_check_branch
    %20 = sbr.rel (0) target = $region21
  $region20: #{decoder_rnn_forward.1} parent=0 // pred_region
    _
  $region21: #{decoder_rnn_forward.1} parent=0 // pred_fallthru
    _
  // Predicated region
  $region22: #{decoder_rnn_forward.1} parent=0 // pred_check
    _
  $region23: #{decoder_rnn_forward.1} parent=0 // pred_check_branch
    %22 = sbr.rel (0) target = $region25
  $region24: #{decoder_rnn_forward.1} parent=0 // pred_region
    _
  $region25: #{decoder_rnn_forward.1} parent=0 // pred_fallthru
    _
  %v23 = vld [vmem:[%s3] sm:$0xff]
  %v24 = vld [vmem:[%s3 + $0x8] sm:$0xff]
  %v25 = vld [vmem:[%s3 + $0x10] sm:$0xff]
  %v26 = vld [vmem:[%s0] sm:$0xff]
  %v27 = vld [vmem:[%s0 + $0x8] sm:$0xff]
  %v28 = vld [vmem:[%s1] sm:$0xff]
  %v29 = vld [vmem:[%s2] sm:$0xff]
  %v30 = vld [vmem:[%s2 + $0x8] sm:$0xff]
  %v31 = vld [vmem:[%s2 + $0x10] sm:$0xff]
  %v32 = vld [vmem:[%s2 + $0x18] sm:$0xff]
  %v33 = vld [vmem:[%s2 + $0x20] sm:$0xff]
  %v34 = vld [vmem:[%s2 + $0x28] sm:$0xff]
  %v35 = vld [vmem:[%s4] sm:$0xff]
  %v36 = vld [vmem:[%s4 + $0x8] sm:$0xff]
  %v37 = vld [vmem:[%s4 + $0x10] sm:$0xff]
  %v38 = vld [vmem:[%s4 + $0x18] sm:$0xff]
  %v39 = vld [vmem:[%s4 + $0x20] sm:$0xff]
  %v40 = vld [vmem:[%s4 + $0x28] sm:$0xff]
  %v41 = vld [vmem:[%s4 + $0x30] sm:$0xff]
  %v42 = vld [vmem:[%s4 + $0x38] sm:$0xff]
  %v43 = vld [vmem:[%s4 + $0x40] sm:$0xff]
  %v44 = vld [vmem:[%s4 + $0x48] sm:$0xff]
  %v45 = vld [vmem:[%s4 + $0x50] sm:$0xff]
  %v46 = vld [vmem:[%s4 + $0x58] sm:$0xff]
  %v47 = vld [vmem:[%s4 + $0x60] sm:$0xf]
  %v48 = vld [vmem:[%s5] sm:$0xff]
  %v49 = vld [vmem:[%s5 + $0x8] sm:$0xff]
  %v50 = vld [vmem:[%s5 + $0x10] sm:$0xff]
  %v51 = vld [vmem:[%s5 + $0x18] sm:$0xff]
  %v52 = vld [vmem:[%s5 + $0x20] sm:$0xff]
  %v53 = vld [vmem:[%s5 + $0x28] sm:$0xff]
  %v54 = vld [vmem:[%s5 + $0x30] sm:$0xff]
  %v55 = vld [vmem:[%s5 + $0x38] sm:$0xff]
  %v56 = vld [vmem:[%s5 + $0x40] sm:$0xff]
  %v57 = vld [vmem:[%s5 + $0x48] sm:$0xf]
  %vm58 = vcmask 130048
  %v60 = vsel %vm58, %v35, 0
  %v63 = vsel %vm58, %v36, 0
  %v66 = vsel %vm58, %v37, 0
  %v69 = vsel %vm58, %v38, 0
  %71 = vmatpush.msra.mxu0 0.0
  %72 = vmatpush.msra.mxu0 0.0
  %73 = vmatpush.msra.mxu0 0.0
  %74 = vmatpush.msra.mxu0 0.0
  %75 = vmatpush.msra.mxu0 0.0
  %76 = vmatpush.msra.mxu0 0.0
  %77 = vmatpush.msra.mxu0 0.0
  %78 = vmatpush.msra.mxu0 0.0
  %79 = vmatpush.msra.mxu0 0.0
  %80 = vmatpush.msra.mxu0 0.0
  %81 = vmatpush.msra.mxu0 0.0
  %82 = vmatpush.msra.mxu0 0.0
  %83 = vmatpush.msra.mxu0 0.0
  %84 = vmatpush.msra.mxu0 0.0
  %85 = vmatpush.msra.mxu0 %v27
  %86 = vmatpush.msra.mxu0 %v26
  %87 = vmatmul.f32.gmra.mxu0 %v60
  %v88 = vpop.f32.mrf.mxu0
  %v89 = vadd.f32 0.0, %v88
  %90 = vmatmul.f32.gmra.mxu0 %v63
  %v91 = vpop.f32.mrf.mxu0
  %v92 = vadd.f32 0.0, %v91
  %93 = vmatmul.f32.gmra.mxu0 %v66
  %v94 = vpop.f32.mrf.mxu0
  %v95 = vadd.f32 0.0, %v94
  %96 = vmatmul.f32.gmra.mxu0 %v69
  %v97 = vpop.f32.mrf.mxu0
  %v98 = vadd.f32 0.0, %v97
  %99 = vdwg.mxu0
  %v100 = vadd.f32 %v29, %v89
  %v101 = vadd.f32 %v30, %v92
  %v102 = vadd.f32 %v31, %v95
  %v103 = vadd.f32 %v32, %v98
  %105 = vset.pattern.permute.xlu0 0
  %106 = vperm.xlu0 %105, %v48
  %v107 = vpop.permute.xlu0 %106
  %110 = vset.pattern.permute.xlu0 0
  %111 = vperm.xlu0 %110, %v49
  %v112 = vpop.permute.xlu0 %111
  %115 = vset.pattern.permute.xlu0 0
  %116 = vperm.xlu0 %115, %v50
  %v117 = vpop.permute.xlu0 %116
  %120 = vset.pattern.permute.xlu0 0
  %121 = vperm.xlu0 %120, %v51
  %v122 = vpop.permute.xlu0 %121
  %vm124 = vcmask 195584
  %v126 = vsel %vm124, %v100, 0
  %v129 = vsel %vm124, %v101, 0
  %v132 = vsel %vm124, %v102, 0
  %v135 = vsel %vm124, %v103, 0
  %137 = vmatpush.msra.mxu0 0.0
  %138 = vmatpush.msra.mxu0 0.0
  %139 = vmatpush.msra.mxu0 0.0
  %140 = vmatpush.msra.mxu0 0.0
  %141 = vmatpush.msra.mxu0 0.0
  %142 = vmatpush.msra.mxu0 0.0
  %143 = vmatpush.msra.mxu0 0.0
  %144 = vmatpush.msra.mxu0 0.0
  %145 = vmatpush.msra.mxu0 0.0
  %146 = vmatpush.msra.mxu0 0.0
  %147 = vmatpush.msra.mxu0 0.0
  %148 = vmatpush.msra.mxu0 0.0
  %149 = vmatpush.msra.mxu0 0.0
  %150 = vmatpush.msra.mxu0 %v25
  %151 = vmatpush.msra.mxu0 %v24
  %152 = vmatpush.msra.mxu0 %v23
  %153 = vmatmul.f32.gmra.mxu0 %v126
  %v154 = vpop.f32.mrf.mxu0
  %v155 = vadd.f32 %v107, %v154
  %156 = vmatmul.f32.gmra.mxu0 %v129
  %v157 = vpop.f32.mrf.mxu0
  %v158 = vadd.f32 %v112, %v157
  %159 = vmatmul.f32.gmra.mxu0 %v132
  %v160 = vpop.f32.mrf.mxu0
  %v161 = vadd.f32 %v117, %v160
  %162 = vmatmul.f32.gmra.mxu0 %v135
  %v163 = vpop.f32.mrf.mxu0
  %v164 = vadd.f32 %v122, %v163
  %165 = vdwg.mxu0
  %v166 = vxor.u32 %v155, 2147483648
  %v167 = vxor.u32 %v158, 2147483648
  %v168 = vmul.f32 %v166, 1.442695
  %v169 = vpow.pop %v168
  %v170 = vmul.f32 %v167, 1.442695
  %v171 = vpow.pop %v170
  %v172 = vadd.f32 %v169, 1.0
  %v173 = vadd.f32 %v171, 1.0
  %v174 = vrcp.pop %v172
  %v175 = vmul.f32 %v172, %v174
  %v176 = vsub.f32 1.0, %v175
  %v177 = vmul.f32 %v174, %v176
  %v178 = vadd.f32 %v174, %v177
  %vm179 = vweird.f32 %v172
  %vm180 = vweird.f32 %v174
  %vm181 = vmor %vm179, %vm180
  %v182 = vsel %vm181, %v174, %v178
  %v183 = vand.u32 2147483647, %v172
  %vm184 = vcmp.eq.f32.partialorder %v183, 8.507059e+37
  %v185 = vand.u32 %v172, 2147483648
  %v186 = vor.u32 1.1754944e-38, %v185
  %v187 = vsel %vm184, %v186, %v182
  %v188 = vmul.f32 1.0, %v187
  %v189 = vrcp.pop %v173
  %v190 = vmul.f32 %v173, %v189
  %v191 = vsub.f32 1.0, %v190
  %v192 = vmul.f32 %v189, %v191
  %v193 = vadd.f32 %v189, %v192
  %vm194 = vweird.f32 %v173
  %vm195 = vweird.f32 %v189
  %vm196 = vmor %vm194, %vm195
  %v197 = vsel %vm196, %v189, %v193
  %v198 = vand.u32 2147483647, %v173
  %vm199 = vcmp.eq.f32.partialorder %v198, 8.507059e+37
  %v200 = vand.u32 %v173, 2147483648
  %v201 = vor.u32 1.1754944e-38, %v200
  %v202 = vsel %vm199, %v201, %v197
  %v203 = vmul.f32 1.0, %v202
  %v204 = vxor.u32 %v161, 2147483648
  %v205 = vxor.u32 %v164, 2147483648
  %v206 = vmul.f32 %v204, 1.442695
  %v207 = vpow.pop %v206
  %v208 = vmul.f32 %v205, 1.442695
  %v209 = vpow.pop %v208
  %v210 = vadd.f32 %v207, 1.0
  %v211 = vadd.f32 %v209, 1.0
  %v212 = vrcp.pop %v210
  %v213 = vmul.f32 %v210, %v212
  %v214 = vsub.f32 1.0, %v213
  %v215 = vmul.f32 %v212, %v214
  %v216 = vadd.f32 %v212, %v215
  %vm217 = vweird.f32 %v210
  %vm218 = vweird.f32 %v212
  %vm219 = vmor %vm217, %vm218
  %v220 = vsel %vm219, %v212, %v216
  %v221 = vand.u32 2147483647, %v210
  %vm222 = vcmp.eq.f32.partialorder %v221, 8.507059e+37
  %v223 = vand.u32 %v210, 2147483648
  %v224 = vor.u32 1.1754944e-38, %v223
  %v225 = vsel %vm222, %v224, %v220
  %v226 = vmul.f32 1.0, %v225
  %v227 = vrcp.pop %v211
  %v228 = vmul.f32 %v211, %v227
  %v229 = vsub.f32 1.0, %v228
  %v230 = vmul.f32 %v227, %v229
  %v231 = vadd.f32 %v227, %v230
  %vm232 = vweird.f32 %v211
  %vm233 = vweird.f32 %v227
  %vm234 = vmor %vm232, %vm233
  %v235 = vsel %vm234, %v227, %v231
  %v236 = vand.u32 2147483647, %v211
  %vm237 = vcmp.eq.f32.partialorder %v236, 8.507059e+37
  %v238 = vand.u32 %v211, 2147483648
  %v239 = vor.u32 1.1754944e-38, %v238
  %v240 = vsel %vm237, %v239, %v235
  %v241 = vmul.f32 1.0, %v240
  %v242 = vmul.f32 %v226, %v26
  %v243 = vmul.f32 %v241, %v27
  %v245 = vsel %vm58, %v39, 0
  %v248 = vsel %vm58, %v40, 0
  %250 = vmatpush.msra.mxu0 0.0
  %251 = vmatpush.msra.mxu0 0.0
  %252 = vmatpush.msra.mxu0 0.0
  %253 = vmatpush.msra.mxu0 0.0
  %254 = vmatpush.msra.mxu0 0.0
  %255 = vmatpush.msra.mxu0 0.0
  %256 = vmatpush.msra.mxu0 0.0
  %257 = vmatpush.msra.mxu0 0.0
  %258 = vmatpush.msra.mxu0 0.0
  %259 = vmatpush.msra.mxu0 0.0
  %260 = vmatpush.msra.mxu0 0.0
  %261 = vmatpush.msra.mxu0 0.0
  %262 = vmatpush.msra.mxu0 0.0
  %263 = vmatpush.msra.mxu0 0.0
  %264 = vmatpush.msra.mxu0 %v243
  %265 = vmatpush.msra.mxu0 %v242
  %266 = vmatmul.f32.gmra.mxu0 %v245
  %v267 = vpop.f32.mrf.mxu0
  %v268 = vadd.f32 0.0, %v267
  %269 = vmatmul.f32.gmra.mxu0 %v248
  %v270 = vpop.f32.mrf.mxu0
  %v271 = vadd.f32 0.0, %v270
  %272 = vdwg.mxu0
  %v273 = vadd.f32 %v33, %v268
  %v274 = vadd.f32 %v34, %v271
  %276 = vset.pattern.permute.xlu0 0
  %277 = vperm.xlu0 %276, %v52
  %v278 = vpop.permute.xlu0 %277
  %281 = vset.pattern.permute.xlu0 0
  %282 = vperm.xlu0 %281, %v53
  %v283 = vpop.permute.xlu0 %282
  %v286 = vsel %vm124, %v273, 0
  %v289 = vsel %vm124, %v274, 0
  %291 = vmatpush.msra.mxu0 0.0
  %292 = vmatpush.msra.mxu0 0.0
  %293 = vmatpush.msra.mxu0 0.0
  %294 = vmatpush.msra.mxu0 0.0
  %295 = vmatpush.msra.mxu0 0.0
  %296 = vmatpush.msra.mxu0 0.0
  %297 = vmatpush.msra.mxu0 0.0
  %298 = vmatpush.msra.mxu0 0.0
  %299 = vmatpush.msra.mxu0 0.0
  %300 = vmatpush.msra.mxu0 0.0
  %301 = vmatpush.msra.mxu0 0.0
  %302 = vmatpush.msra.mxu0 0.0
  %303 = vmatpush.msra.mxu0 0.0
  %304 = vmatpush.msra.mxu0 %v25
  %305 = vmatpush.msra.mxu0 %v24
  %306 = vmatpush.msra.mxu0 %v23
  %307 = vmatmul.f32.gmra.mxu0 %v286
  %v308 = vpop.f32.mrf.mxu0
  %v309 = vadd.f32 %v278, %v308
  %310 = vmatmul.f32.gmra.mxu0 %v289
  %v311 = vpop.f32.mrf.mxu0
  %v312 = vadd.f32 %v283, %v311
  %313 = vdwg.mxu0
  %v314 = vtanh.pop %v309
  %v315 = vtanh.pop %v312
  %v316 = vmul.f32 %v188, %v26
  %v317 = vmul.f32 %v203, %v27
  %v318 = vsub.f32 1.0, %v188
  %v319 = vsub.f32 1.0, %v203
  %v320 = vmul.f32 %v318, %v314
  %v321 = vmul.f32 %v319, %v315
  %v322 = vadd.f32 %v316, %v320
  %v323 = vadd.f32 %v317, %v321
  %v324 = vmax.f32 %v322, 0.0
  %v325 = vmax.f32 %v323, 0.0
  %v327 = vsel %vm58, %v41, 0
  %v330 = vsel %vm58, %v42, 0
  %v333 = vsel %vm58, %v43, 0
  %335 = vmatpush.msra.mxu0 0.0
  %336 = vmatpush.msra.mxu0 0.0
  %337 = vmatpush.msra.mxu0 0.0
  %338 = vmatpush.msra.mxu0 0.0
  %339 = vmatpush.msra.mxu0 0.0
  %340 = vmatpush.msra.mxu0 0.0
  %341 = vmatpush.msra.mxu0 0.0
  %342 = vmatpush.msra.mxu0 0.0
  %343 = vmatpush.msra.mxu0 0.0
  %344 = vmatpush.msra.mxu0 0.0
  %345 = vmatpush.msra.mxu0 0.0
  %346 = vmatpush.msra.mxu0 0.0
  %347 = vmatpush.msra.mxu0 0.0
  %348 = vmatpush.msra.mxu0 0.0
  %349 = vmatpush.msra.mxu0 %v325
  %350 = vmatpush.msra.mxu0 %v324
  %351 = vmatmul.f32.gmra.mxu0 %v327
  %v352 = vpop.f32.mrf.mxu0
  %v353 = vadd.f32 0.0, %v352
  %354 = vmatmul.f32.gmra.mxu0 %v330
  %v355 = vpop.f32.mrf.mxu0
  %v356 = vadd.f32 0.0, %v355
  %357 = vmatmul.f32.gmra.mxu0 %v333
  %v358 = vpop.f32.mrf.mxu0
  %v359 = vadd.f32 0.0, %v358
  %360 = vdwg.mxu0
  %vm361 = vcmask 64512
  %v363 = vsel %vm361, %v44, 0
  %v366 = vsel %vm361, %v45, 0
  %368 = vmatpush.msra.mxu0 0.0
  %369 = vmatpush.msra.mxu0 0.0
  %370 = vmatpush.msra.mxu0 0.0
  %371 = vmatpush.msra.mxu0 0.0
  %372 = vmatpush.msra.mxu0 0.0
  %373 = vmatpush.msra.mxu0 0.0
  %374 = vmatpush.msra.mxu0 0.0
  %375 = vmatpush.msra.mxu0 0.0
  %376 = vmatpush.msra.mxu0 0.0
  %377 = vmatpush.msra.mxu0 0.0
  %378 = vmatpush.msra.mxu0 0.0
  %379 = vmatpush.msra.mxu0 0.0
  %380 = vmatpush.msra.mxu0 0.0
  %381 = vmatpush.msra.mxu0 0.0
  %382 = vmatpush.msra.mxu0 0.0
  %383 = vmatpush.msra.mxu0 %v28
  %384 = vmatmul.f32.gmra.mxu0 %v363
  %v385 = vpop.f32.mrf.mxu0
  %v386 = vadd.f32 0.0, %v385
  %387 = vmatmul.f32.gmra.mxu0 %v366
  %v388 = vpop.f32.mrf.mxu0
  %v389 = vadd.f32 0.0, %v388
  %390 = vdwg.mxu0
  %v391 = vadd.f32 %v353, %v386
  %v392 = vadd.f32 %v356, %v389
  %394 = vset.pattern.permute.xlu0 0
  %395 = vperm.xlu0 %394, %v54
  %v396 = vpop.permute.xlu0 %395
  %399 = vset.pattern.permute.xlu0 0
  %400 = vperm.xlu0 %399, %v55
  %v401 = vpop.permute.xlu0 %400
  %v404 = vsel %vm124, %v391, 0
  %v407 = vsel %vm124, %v392, 0
  %409 = vmatpush.msra.mxu0 0.0
  %410 = vmatpush.msra.mxu0 0.0
  %411 = vmatpush.msra.mxu0 0.0
  %412 = vmatpush.msra.mxu0 0.0
  %413 = vmatpush.msra.mxu0 0.0
  %414 = vmatpush.msra.mxu0 0.0
  %415 = vmatpush.msra.mxu0 0.0
  %416 = vmatpush.msra.mxu0 0.0
  %417 = vmatpush.msra.mxu0 0.0
  %418 = vmatpush.msra.mxu0 0.0
  %419 = vmatpush.msra.mxu0 0.0
  %420 = vmatpush.msra.mxu0 0.0
  %421 = vmatpush.msra.mxu0 0.0
  %422 = vmatpush.msra.mxu0 %v25
  %423 = vmatpush.msra.mxu0 %v24
  %424 = vmatpush.msra.mxu0 %v23
  %425 = vmatmul.f32.gmra.mxu0 %v404
  %v426 = vpop.f32.mrf.mxu0
  %v427 = vadd.f32 %v396, %v426
  %428 = vmatmul.f32.gmra.mxu0 %v407
  %v429 = vpop.f32.mrf.mxu0
  %v430 = vadd.f32 %v401, %v429
  %431 = vdwg.mxu0
  %v432 = vxor.u32 %v427, 2147483648
  %v433 = vmul.f32 %v432, 1.442695
  %v434 = vpow.pop %v433
  %v435 = vadd.f32 %v434, 1.0
  %v436 = vrcp.pop %v435
  %v437 = vmul.f32 %v435, %v436
  %v438 = vsub.f32 1.0, %v437
  %v439 = vmul.f32 %v436, %v438
  %v440 = vadd.f32 %v436, %v439
  %vm441 = vweird.f32 %v435
  %vm442 = vweird.f32 %v436
  %vm443 = vmor %vm441, %vm442
  %v444 = vsel %vm443, %v436, %v440
  %v445 = vand.u32 2147483647, %v435
  %vm446 = vcmp.eq.f32.partialorder %v445, 8.507059e+37
  %v447 = vand.u32 %v435, 2147483648
  %v448 = vor.u32 1.1754944e-38, %v447
  %v449 = vsel %vm446, %v448, %v444
  %v450 = vmul.f32 1.0, %v449
  %v451 = vxor.u32 %v430, 2147483648
  %v452 = vmul.f32 %v451, 1.442695
  %v453 = vpow.pop %v452
  %v454 = vadd.f32 %v453, 1.0
  %v455 = vrcp.pop %v454
  %v456 = vmul.f32 %v454, %v455
  %v457 = vsub.f32 1.0, %v456
  %v458 = vmul.f32 %v455, %v457
  %v459 = vadd.f32 %v455, %v458
  %vm460 = vweird.f32 %v454
  %vm461 = vweird.f32 %v455
  %vm462 = vmor %vm460, %vm461
  %v463 = vsel %vm462, %v455, %v459
  %v464 = vand.u32 2147483647, %v454
  %vm465 = vcmp.eq.f32.partialorder %v464, 8.507059e+37
  %v466 = vand.u32 %v454, 2147483648
  %v467 = vor.u32 1.1754944e-38, %v466
  %v468 = vsel %vm465, %v467, %v463
  %v469 = vmul.f32 1.0, %v468
  %v470 = vmul.f32 %v469, %v28
  %v472 = vsel %vm361, %v46, 0
  %474 = vmatpush.msra.mxu0 0.0
  %475 = vmatpush.msra.mxu0 0.0
  %476 = vmatpush.msra.mxu0 0.0
  %477 = vmatpush.msra.mxu0 0.0
  %478 = vmatpush.msra.mxu0 0.0
  %479 = vmatpush.msra.mxu0 0.0
  %480 = vmatpush.msra.mxu0 0.0
  %481 = vmatpush.msra.mxu0 0.0
  %482 = vmatpush.msra.mxu0 0.0
  %483 = vmatpush.msra.mxu0 0.0
  %484 = vmatpush.msra.mxu0 0.0
  %485 = vmatpush.msra.mxu0 0.0
  %486 = vmatpush.msra.mxu0 0.0
  %487 = vmatpush.msra.mxu0 0.0
  %488 = vmatpush.msra.mxu0 0.0
  %489 = vmatpush.msra.mxu0 %v470
  %490 = vmatmul.f32.gmra.mxu0 %v472
  %v491 = vpop.f32.mrf.mxu0
  %v492 = vadd.f32 0.0, %v491
  %493 = vdwg.mxu0
  %v494 = vadd.f32 %v359, %v492
  %496 = vset.pattern.permute.xlu0 0
  %497 = vperm.xlu0 %496, %v56
  %v498 = vpop.permute.xlu0 %497
  %v501 = vsel %vm124, %v494, 0
  %503 = vmatpush.msra.mxu0 0.0
  %504 = vmatpush.msra.mxu0 0.0
  %505 = vmatpush.msra.mxu0 0.0
  %506 = vmatpush.msra.mxu0 0.0
  %507 = vmatpush.msra.mxu0 0.0
  %508 = vmatpush.msra.mxu0 0.0
  %509 = vmatpush.msra.mxu0 0.0
  %510 = vmatpush.msra.mxu0 0.0
  %511 = vmatpush.msra.mxu0 0.0
  %512 = vmatpush.msra.mxu0 0.0
  %513 = vmatpush.msra.mxu0 0.0
  %514 = vmatpush.msra.mxu0 0.0
  %515 = vmatpush.msra.mxu0 0.0
  %516 = vmatpush.msra.mxu0 %v25
  %517 = vmatpush.msra.mxu0 %v24
  %518 = vmatpush.msra.mxu0 %v23
  %519 = vmatmul.f32.gmra.mxu0 %v501
  %v520 = vpop.f32.mrf.mxu0
  %v521 = vadd.f32 %v498, %v520
  %522 = vdwg.mxu0
  %v523 = vtanh.pop %v521
  %v524 = vmul.f32 %v450, %v28
  %v525 = vsub.f32 1.0, %v450
  %v526 = vmul.f32 %v525, %v523
  %v527 = vadd.f32 %v524, %v526
  %v528 = vmax.f32 %v527, 0.0
  %v530 = vsel %vm361, %v47, 0
  %532 = vmatpush.msra.mxu0 0.0
  %533 = vmatpush.msra.mxu0 0.0
  %534 = vmatpush.msra.mxu0 0.0
  %535 = vmatpush.msra.mxu0 0.0
  %536 = vmatpush.msra.mxu0 0.0
  %537 = vmatpush.msra.mxu0 0.0
  %538 = vmatpush.msra.mxu0 0.0
  %539 = vmatpush.msra.mxu0 0.0
  %540 = vmatpush.msra.mxu0 0.0
  %541 = vmatpush.msra.mxu0 0.0
  %542 = vmatpush.msra.mxu0 0.0
  %543 = vmatpush.msra.mxu0 0.0
  %544 = vmatpush.msra.mxu0 0.0
  %545 = vmatpush.msra.mxu0 0.0
  %546 = vmatpush.msra.mxu0 0.0
  %547 = vmatpush.msra.mxu0 %v528
  %548 = vmatmul.f32.gmra.mxu0 %v530
  %v549 = vpop.f32.mrf.mxu0
  %v550 = vadd.f32 0.0, %v549
  %551 = vdwg.mxu0
  %553 = vset.pattern.permute.xlu0 0
  %554 = vperm.xlu0 %553, %v57
  %v555 = vpop.permute.xlu0 %554
  %v558 = vsel %vm124, %v550, 0
  %560 = vmatpush.msra.mxu0 0.0
  %561 = vmatpush.msra.mxu0 0.0
  %562 = vmatpush.msra.mxu0 0.0
  %563 = vmatpush.msra.mxu0 0.0
  %564 = vmatpush.msra.mxu0 0.0
  %565 = vmatpush.msra.mxu0 0.0
  %566 = vmatpush.msra.mxu0 0.0
  %567 = vmatpush.msra.mxu0 0.0
  %568 = vmatpush.msra.mxu0 0.0
  %569 = vmatpush.msra.mxu0 0.0
  %570 = vmatpush.msra.mxu0 0.0
  %571 = vmatpush.msra.mxu0 0.0
  %572 = vmatpush.msra.mxu0 0.0
  %573 = vmatpush.msra.mxu0 %v25
  %574 = vmatpush.msra.mxu0 %v24
  %575 = vmatpush.msra.mxu0 %v23
  %576 = vmatmul.f32.gmra.mxu0 %v558
  %v577 = vpop.f32.mrf.mxu0
  %v578 = vadd.f32 %v555, %v577
  %579 = vdwg.mxu0
  %v580 = vxor.u32 %v578, 2147483648
  %v581 = vmul.f32 %v580, 1.442695
  %v582 = vpow.pop %v581
  %v583 = vadd.f32 %v582, 1.0
  %v584 = vrcp.pop %v583
  %v585 = vmul.f32 %v583, %v584
  %v586 = vsub.f32 1.0, %v585
  %v587 = vmul.f32 %v584, %v586
  %v588 = vadd.f32 %v584, %v587
  %vm589 = vweird.f32 %v583
  %vm590 = vweird.f32 %v584
  %vm591 = vmor %vm589, %vm590
  %v592 = vsel %vm591, %v584, %v588
  %v593 = vand.u32 2147483647, %v583
  %vm594 = vcmp.eq.f32.partialorder %v593, 8.507059e+37
  %v595 = vand.u32 %v583, 2147483648
  %v596 = vor.u32 1.1754944e-38, %v595
  %v597 = vsel %vm594, %v596, %v592
  %v598 = vmul.f32 1.0, %v597
  %v599 = vtanh.pop %v578
  %v600 = vsub.f32 1.0, %v598
  %v602 = vrot.slane %v599, 2
  %v604 = vmul.f32 %v600, %v602
  %v605 = vmax.f32 %v604, 0.0
  %vm606 = vcmask 189440
  %607 = vst.msk [vmem:[%s6] sm:$0x3] %vm606, %v605
  // Predicated region
  $region26: #{decoder_rnn_forward.1} parent=0 // pred_check
    _
  $region27: #{decoder_rnn_forward.1} parent=0 // pred_check_branch
    %609 = sbr.rel (0) target = $region29
  $region28: #{decoder_rnn_forward.1} parent=0 // pred_region
    _
  $region29: #{decoder_rnn_forward.1} parent=0 // pred_fallthru
    _
  // Predicated region
  $region30: #{decoder_rnn_forward.1} parent=0 // pred_check
    _
  $region31: #{decoder_rnn_forward.1} parent=0 // pred_check_branch
    %611 = sbr.rel (0) target = $region33
  $region32: #{decoder_rnn_forward.1} parent=0 // pred_region
    _
  $region33: #{decoder_rnn_forward.1} parent=0 // pred_fallthru
    _

</llo_original>
